<compile_context>
chip_gen: v7x
topology: tpu7x:2x2x1
jax: 0.10.0
libtpu: 0.0.40
codegen_flags: <defaults>
</compile_context>

<pallas_src>
import jax
import jax.numpy as jnp
import numpy as np
from jax.experimental import pallas as pl
from jax.experimental.pallas import tpu as pltpu

_C1 = 10          # out-channels of the kernel-size-1 char conv (module spec: [10, 30, 60])
_NCH = 100        # total char-conv channels
_NCH_PAD = 128    # padded to one lane tile
_NEG = -1e30


def embedding_kernel(word_ids_ref, char_ids_ref, gconv_ref, maskb_ref, wall_ref,
                     out_ref):
    rows = out_ref.shape[0]              # rows (flattened B*S) in this tile
    _, W, NCHp = maskb_ref.shape         # chars per word, padded char channels
    NCp = gconv_ref.shape[1]             # padded char vocab (one-hot width / matmul K)
    NWp = wall_ref.shape[0] - NCHp       # padded word vocab
    RW = char_ids_ref.shape[0]           # rows * W

    # ---- char path: 3 pre-shifted id columns -> one-hot -> folded-conv matmuls ----
    cids = char_ids_ref[...]                                           # (RW, 3) int32
    iota_c = jax.lax.broadcasted_iota(jnp.int32, (RW, NCp), 1)         # built ONCE
    h = None
    for j in range(3):                                                 # conv taps 0..2
        oh = (cids[:, j:j + 1] == iota_c).astype(jnp.bfloat16)         # direct bool->bf16
        d = jnp.dot(oh, gconv_ref[j], preferred_element_type=jnp.float32)
        h = d if h is None else h + d                                  # (RW, NCHp) f32
    # (RW, NCHp) -> (rows, W, NCHp) is layout-free for f32 when W % 8 == 0 (W = 8 here).
    h = h.reshape(rows, W, NCHp) + maskb_ref[...]     # + bias, -1e30 at invalid positions
    feats = jnp.maximum(jnp.max(h, axis=1), 0.0)      # max over char positions, then ReLU
                                                      # (bias/ReLU hoist past max is exact)

    # ---- word path + fused output matmul: K = NWp + NCHp (= 128 + 128) ----
    wids = word_ids_ref[...]                                           # (rows, 1) int32
    iota_w = jax.lax.broadcasted_iota(jnp.int32, (rows, NWp), 1)
    oh_w = (wids == iota_w).astype(jnp.bfloat16)                       # (rows, NWp)
    lhs = jnp.concatenate([oh_w, feats.astype(jnp.bfloat16)], axis=1)  # 128-aligned concat
    out_ref[...] = jnp.dot(lhs, wall_ref[...],
                           preferred_element_type=jnp.float32).astype(out_ref.dtype)


def _round_up(x, m):
    return (x + m - 1) // m * m


def embedding_forward(params, word_ids, char_ids, *, row_tile=512):
    """Forward of the `Embedding` module (eval mode).
    word_ids: (B, S) int, char_ids: (B, S, W) int -> (B, S, out_dim) float32."""
    B, S = word_ids.shape
    W = char_ids.shape[2]
    assert W >= 3, "kernel-size-3 char convs need at least 3 chars per word"
    R = B * S
    NW, word_dim = params["word_table"].shape
    NC = params["char_table"].shape[0]
    out_dim = params["lb"].shape[-1]
    NWp = _round_up(NW, 128)
    NCp = _round_up(NC, 128)
    NCHp = _NCH_PAD

    # ---- fold tables / weights once (plain JAX over a few KiB of data) ----
    f32 = jnp.float32
    wt = params["word_table"].astype(f32)
    ct = params["char_table"].astype(f32)
    lw = params["lw"].astype(f32)

    # word gather o 1x1-conv (+ its bias; exact: each id selects exactly one row),
    # stacked with the char-feature half of the 1x1 conv at a 128-lane boundary so the
    # kernel does a single K=256 output matmul.
    # TODO(synk): for realistic vocabularies (10k+), replace the resident folded table +
    # one-hot with a row gather (scalar-prefetch ids + pl.Element index_map / manual DMA).
    wlw = wt @ lw[:word_dim] + params["lb"].astype(f32)                       # (NW, out)
    wall = jnp.zeros((NWp + NCHp, out_dim), f32)
    wall = wall.at[:NW].set(wlw)
    wall = wall.at[NWp:NWp + _NCH].set(lw[word_dim:word_dim + _NCH])
    wall = wall.astype(jnp.bfloat16)

    # char gather o conv folded: one (NCp, NCHp) slab per conv tap; the k=1 conv only
    # contributes through tap 0.
    w3 = jnp.concatenate([params["w3a"], params["w3b"]], axis=2).astype(f32)  # (3, C, 90)
    gconv = jnp.zeros((3, NCp, NCHp), f32)
    gconv = gconv.at[0, :NC, :_C1].set(ct @ params["w1"][0].astype(f32))
    for j in range(3):
        gconv = gconv.at[j, :NC, _C1:_NCH].set(ct @ w3[j])
    gconv = gconv.astype(jnp.bfloat16)

    # conv bias + position-validity mask folded into ONE (1, W, NCHp) additive tensor.
    cbias = jnp.concatenate(
        [params["b1"], params["b3a"], params["b3b"]], axis=1).astype(f32)[0]  # (100,)
    maskb = jnp.zeros((1, W, NCHp), f32).at[:, :, :_NCH].set(cbias)
    maskb = maskb.at[:, W - 2:, _C1:_NCH].set(_NEG)   # k=3 convs: last 2 positions invalid

    # ---- flatten (B, S); pre-shift char ids in the wrapper (conv taps 0/1/2) ----
    wid = word_ids.reshape(R, 1).astype(jnp.int32)
    cid = char_ids.reshape(R, W).astype(jnp.int32)
    cid3 = jnp.stack([jnp.roll(cid, -j, axis=1) for j in range(3)], axis=-1)  # (R, W, 3)
    cid3 = cid3.reshape(R * W, 3)

    # row tile: large (amortize ~0.35us/step; weights stay resident), but keep >= 2 grid
    # steps when possible so both v7x TensorCores get work; always a multiple of 8.
    rt = min(row_tile, _round_up(max(8, (R + 1) // 2), 8))
    R_pad = _round_up(R, rt)
    if R_pad != R:
        wid = jnp.pad(wid, ((0, R_pad - R), (0, 0)))          # id 0 == padding_idx
        cid3 = jnp.pad(cid3, ((0, (R_pad - R) * W), (0, 0)))

    out = pl.pallas_call(
        embedding_kernel,
        out_shape=jax.ShapeDtypeStruct((R_pad, out_dim), jnp.float32),
        grid=(R_pad // rt,),
        in_specs=[
            pl.BlockSpec((rt, 1), lambda i: (i, 0)),            # word ids
            pl.BlockSpec((rt * W, 3), lambda i: (i, 0)),        # pre-shifted char ids
            pl.BlockSpec(gconv.shape, lambda i: (0, 0, 0)),     # resident weight slabs
            pl.BlockSpec(maskb.shape, lambda i: (0, 0, 0)),     # resident bias+mask
            pl.BlockSpec(wall.shape, lambda i: (0, 0)),         # resident fused out-proj
        ],
        out_specs=pl.BlockSpec((rt, out_dim), lambda i: (i, 0)),  # lane-dense output
        compiler_params=pltpu.CompilerParams(
            dimension_semantics=("parallel",),
            vmem_limit_bytes=48 * 1024 * 1024),
    )(wid, cid3, gconv, maskb, wall)

    # TODO(synk): nn.Dropout is identity at inference time; not implemented in-kernel.
    return out[:R].reshape(B, S, out_dim)


def make_params(key, num_words, num_chars, word_dim, char_dim, out_dim):
    ks = jax.random.split(key, 10)

    def init(k, shape, scale=0.1):
        return (jax.random.normal(k, shape, jnp.float32) * scale).astype(jnp.float32)

    params = {
        # embedding tables, row 0 zeroed (padding_idx=0)
        "word_table": init(ks[0], (num_words, word_dim)).at[0].set(0.0),
        "char_table": init(ks[1], (num_chars, char_dim)).at[0].set(0.0),
        # char conv weights stored as (kernel_width, in_ch=char_dim, out_ch)
        "w1":  init(ks[2], (1, char_dim, 10)),
        "b1":  init(ks[3], (1, 10)),
        "w3a": init(ks[4], (3, char_dim, 30)),
        "b3a": init(ks[5], (1, 30)),
        "w3b": init(ks[6], (3, char_dim, 60)),
        "b3b": init(ks[7], (1, 60)),
        # Conv1D(kernel=1) == linear: (word_dim + 100, out_dim)
        "lw":  init(ks[8], (word_dim + 100, out_dim)),
        "lb":  init(ks[9], (1, out_dim)),
    }
    return params


def reference_forward(params, word_ids, char_ids):
    """Plain-JAX f32 reference mirroring the PyTorch forward (eval mode)."""
    word_emb = params["word_table"][word_ids]           # (B, S, D)
    ce = params["char_table"][char_ids]                 # (B, S, W, C)
    Wlen = ce.shape[2]
    feats = []
    for w, b, k in [(params["w1"], params["b1"], 1),
                    (params["w3a"], params["b3a"], 3),
                    (params["w3b"], params["b3b"], 3)]:
        Lout = Wlen - k + 1
        acc = sum(jnp.einsum("bslc,co->bslo", ce[:, :, j:j + Lout, :], w[j])
                  for j in range(k))
        acc = jax.nn.relu(acc + b[0])
        feats.append(acc.max(axis=2))                   # max over char positions
    char_feat = jnp.concatenate(feats, axis=-1)         # (B, S, 100)
    emb = jnp.concatenate([word_emb, char_feat], axis=-1)
    return emb @ params["lw"] + params["lb"][0]


if __name__ == "__main__":
    num_words, num_chars = 50, 20
    word_dim, char_dim = 32, 16
    out_dim = 128
    B, S, W = 2, 8, 8          # batch, sequence length, chars per word

    key = jax.random.PRNGKey(0)
    kp, kw, kc = jax.random.split(key, 3)
    params = make_params(kp, num_words, num_chars, word_dim, char_dim, out_dim)
    word_ids = jax.random.randint(kw, (B, S), 0, num_words, dtype=jnp.int32)
    char_ids = jax.random.randint(kc, (B, S, W), 0, num_chars, dtype=jnp.int32)

    out = jax.block_until_ready(embedding_forward(params, word_ids, char_ids))
    assert out.shape == (B, S, out_dim), out.shape

    ref = jax.block_until_ready(reference_forward(params, word_ids, char_ids))
    # bf16 matmul operands with f32 accumulation -> loose-ish tolerance vs f32 reference
    np.testing.assert_allclose(np.asarray(out), np.asarray(ref), atol=2e-2, rtol=2e-2)

    print("KERNEL_OK")
</pallas_src>

<mosaic_0001>
module attributes {stable_mosaic.version = 11 : i64} {
  func.func @embedding_kernel(%arg0: i32, %arg1: memref<8x1xi32, #tpu.memory_space<vmem>>, %arg2: memref<64x3xi32, #tpu.memory_space<vmem>>, %arg3: memref<3x128x128xbf16, #tpu.memory_space<vmem>>, %arg4: memref<1x8x128xf32, #tpu.memory_space<vmem>>, %arg5: memref<256x128xbf16, #tpu.memory_space<vmem>>, %arg6: memref<8x128xf32, #tpu.memory_space<vmem>>) attributes {dimension_semantics = [#tpu.dimension_semantics<parallel>], iteration_bounds = array<i64: 2>, scalar_prefetch = 0 : i64, scratch_operands = 0 : i64, tpu.core_type = #tpu.core_type<tc>, window_params = [{transform_indices = @transform_0, window_bounds = array<i64: 8, 1>}, {transform_indices = @transform_1, window_bounds = array<i64: 64, 3>}, {pipeline_mode = #tpu.pipeline_mode<synchronous>, transform_indices = @transform_2, window_bounds = array<i64: 3, 128, 128>}, {pipeline_mode = #tpu.pipeline_mode<synchronous>, transform_indices = @transform_3, window_bounds = array<i64: 1, 8, 128>}, {pipeline_mode = #tpu.pipeline_mode<synchronous>, transform_indices = @transform_4, window_bounds = array<i64: 256, 128>}, {transform_indices = @transform_5, window_bounds = array<i64: 8, 128>}]} {
    %c0 = arith.constant 0 : index
    %c0_0 = arith.constant 0 : index
    %0 = vector.load %arg2[%c0, %c0_0] : memref<64x3xi32, #tpu.memory_space<vmem>>, vector<64x3xi32>
    %1 = tpu.iota {dimensions = array<i32: 1>} : vector<64x128xi32>
    %2 = vector.extract_strided_slice %0 {offsets = [0, 0], sizes = [64, 1], strides = [1, 1]} : vector<64x3xi32> to vector<64x1xi32>
    %3 = vector.broadcast %2 : vector<64x1xi32> to vector<64x128xi32>
    %4 = arith.cmpi eq, %3, %1 : vector<64x128xi32>
    %5 = arith.extui %4 : vector<64x128xi1> to vector<64x128xi32>
    %6 = arith.sitofp %5 : vector<64x128xi32> to vector<64x128xf32>
    %7 = arith.truncf %6 : vector<64x128xf32> to vector<64x128xbf16>
    %c0_1 = arith.constant 0 : index
    %c0_2 = arith.constant 0 : index
    %c0_3 = arith.constant 0 : index
    %8 = vector.load %arg3[%c0_1, %c0_2, %c0_3] : memref<3x128x128xbf16, #tpu.memory_space<vmem>>, vector<1x128x128xbf16>
    %9 = vector.shape_cast %8 : vector<1x128x128xbf16> to vector<128x128xbf16>
    %cst = arith.constant dense<0.000000e+00> : vector<64x128xf32>
    %10 = tpu.matmul %7, %9, %cst {dimension_numbers = #tpu.dot_dimension_numbers<[1], [0], [0], [1], [0, 0, 1, 1], [], []>} : vector<64x128xbf16>, vector<128x128xbf16>, vector<64x128xf32> -> vector<64x128xf32>
    %11 = vector.extract_strided_slice %0 {offsets = [0, 1], sizes = [64, 1], strides = [1, 1]} : vector<64x3xi32> to vector<64x1xi32>
    %12 = vector.broadcast %11 : vector<64x1xi32> to vector<64x128xi32>
    %13 = arith.cmpi eq, %12, %1 : vector<64x128xi32>
    %14 = arith.extui %13 : vector<64x128xi1> to vector<64x128xi32>
    %15 = arith.sitofp %14 : vector<64x128xi32> to vector<64x128xf32>
    %16 = arith.truncf %15 : vector<64x128xf32> to vector<64x128xbf16>
    %c1 = arith.constant 1 : index
    %c0_4 = arith.constant 0 : index
    %c0_5 = arith.constant 0 : index
    %17 = vector.load %arg3[%c1, %c0_4, %c0_5] : memref<3x128x128xbf16, #tpu.memory_space<vmem>>, vector<1x128x128xbf16>
    %18 = vector.shape_cast %17 : vector<1x128x128xbf16> to vector<128x128xbf16>
    %cst_6 = arith.constant dense<0.000000e+00> : vector<64x128xf32>
    %19 = tpu.matmul %16, %18, %cst_6 {dimension_numbers = #tpu.dot_dimension_numbers<[1], [0], [0], [1], [0, 0, 1, 1], [], []>} : vector<64x128xbf16>, vector<128x128xbf16>, vector<64x128xf32> -> vector<64x128xf32>
    %20 = arith.addf %10, %19 : vector<64x128xf32>
    %21 = vector.extract_strided_slice %0 {offsets = [0, 2], sizes = [64, 1], strides = [1, 1]} : vector<64x3xi32> to vector<64x1xi32>
    %22 = vector.broadcast %21 : vector<64x1xi32> to vector<64x128xi32>
    %23 = arith.cmpi eq, %22, %1 : vector<64x128xi32>
    %24 = arith.extui %23 : vector<64x128xi1> to vector<64x128xi32>
    %25 = arith.sitofp %24 : vector<64x128xi32> to vector<64x128xf32>
    %26 = arith.truncf %25 : vector<64x128xf32> to vector<64x128xbf16>
    %c2 = arith.constant 2 : index
    %c0_7 = arith.constant 0 : index
    %c0_8 = arith.constant 0 : index
    %27 = vector.load %arg3[%c2, %c0_7, %c0_8] : memref<3x128x128xbf16, #tpu.memory_space<vmem>>, vector<1x128x128xbf16>
    %28 = vector.shape_cast %27 : vector<1x128x128xbf16> to vector<128x128xbf16>
    %cst_9 = arith.constant dense<0.000000e+00> : vector<64x128xf32>
    %29 = tpu.matmul %26, %28, %cst_9 {dimension_numbers = #tpu.dot_dimension_numbers<[1], [0], [0], [1], [0, 0, 1, 1], [], []>} : vector<64x128xbf16>, vector<128x128xbf16>, vector<64x128xf32> -> vector<64x128xf32>
    %30 = arith.addf %20, %29 : vector<64x128xf32>
    %31 = vector.shape_cast %30 : vector<64x128xf32> to vector<8x8x128xf32>
    %c0_10 = arith.constant 0 : index
    %c0_11 = arith.constant 0 : index
    %c0_12 = arith.constant 0 : index
    %32 = vector.load %arg4[%c0_10, %c0_11, %c0_12] : memref<1x8x128xf32, #tpu.memory_space<vmem>>, vector<1x8x128xf32>
    %33 = vector.broadcast %32 : vector<1x8x128xf32> to vector<8x8x128xf32>
    %34 = arith.addf %31, %33 : vector<8x8x128xf32>
    %cst_13 = arith.constant dense<0xFF800000> : vector<8x128xf32>
    %35 = vector.multi_reduction <maximumf>, %34, %cst_13 [1] : vector<8x8x128xf32> to vector<8x128xf32>
    %cst_14 = arith.constant 0.000000e+00 : f32
    %36 = vector.broadcast %cst_14 : f32 to vector<8x128xf32>
    %37 = arith.maximumf %35, %36 : vector<8x128xf32>
    %c0_15 = arith.constant 0 : index
    %c0_16 = arith.constant 0 : index
    %38 = vector.load %arg1[%c0_15, %c0_16] : memref<8x1xi32, #tpu.memory_space<vmem>>, vector<8x1xi32>
    %39 = tpu.iota {dimensions = array<i32: 1>} : vector<8x128xi32>
    %40 = vector.broadcast %38 : vector<8x1xi32> to vector<8x128xi32>
    %41 = arith.cmpi eq, %40, %39 : vector<8x128xi32>
    %42 = arith.extui %41 : vector<8x128xi1> to vector<8x128xi32>
    %43 = arith.sitofp %42 : vector<8x128xi32> to vector<8x128xf32>
    %44 = arith.truncf %43 : vector<8x128xf32> to vector<8x128xbf16>
    %45 = arith.truncf %37 : vector<8x128xf32> to vector<8x128xbf16>
    %46 = tpu.concatenate %44, %45 in 1 : vector<8x128xbf16>, vector<8x128xbf16> -> vector<8x256xbf16>
    %c0_17 = arith.constant 0 : index
    %c0_18 = arith.constant 0 : index
    %47 = vector.load %arg5[%c0_17, %c0_18] : memref<256x128xbf16, #tpu.memory_space<vmem>>, vector<256x128xbf16>
    %cst_19 = arith.constant dense<0.000000e+00> : vector<8x128xf32>
    %48 = tpu.matmul %46, %47, %cst_19 {dimension_numbers = #tpu.dot_dimension_numbers<[1], [0], [0], [1], [0, 0, 1, 1], [], []>} : vector<8x256xbf16>, vector<256x128xbf16>, vector<8x128xf32> -> vector<8x128xf32>
    %c0_20 = arith.constant 0 : index
    %c0_21 = arith.constant 0 : index
    %49 = vector.load %arg6[%c0_20, %c0_21] : memref<8x128xf32, #tpu.memory_space<vmem>>, vector<8x128xf32>
    tpu.vector_store %arg6[%c0_20, %c0_21], %48 {strides = array<i32>} : memref<8x128xf32, #tpu.memory_space<vmem>>, vector<8x128xf32>,
    return
  }
  func.func @transform_0(%arg0: i32) -> (i32, i32) {
    %c0_i32 = arith.constant 0 : i32
    %c0_i32_0 = arith.constant 0 : i32
    return %arg0, %c0_i32 : i32, i32
  }
  func.func @transform_1(%arg0: i32) -> (i32, i32) {
    %c0_i32 = arith.constant 0 : i32
    %c0_i32_0 = arith.constant 0 : i32
    return %arg0, %c0_i32 : i32, i32
  }
  func.func @transform_2(%arg0: i32) -> (i32, i32, i32) {
    %c0_i32 = arith.constant 0 : i32
    %c0_i32_0 = arith.constant 0 : i32
    %c0_i32_1 = arith.constant 0 : i32
    %c0_i32_2 = arith.constant 0 : i32
    return %c0_i32, %c0_i32_0, %c0_i32_1 : i32, i32, i32
  }
  func.func @transform_3(%arg0: i32) -> (i32, i32, i32) {
    %c0_i32 = arith.constant 0 : i32
    %c0_i32_0 = arith.constant 0 : i32
    %c0_i32_1 = arith.constant 0 : i32
    %c0_i32_2 = arith.constant 0 : i32
    return %c0_i32, %c0_i32_0, %c0_i32_1 : i32, i32, i32
  }
  func.func @transform_4(%arg0: i32) -> (i32, i32) {
    %c0_i32 = arith.constant 0 : i32
    %c0_i32_0 = arith.constant 0 : i32
    %c0_i32_1 = arith.constant 0 : i32
    return %c0_i32, %c0_i32_0 : i32, i32
  }
  func.func @transform_5(%arg0: i32) -> (i32, i32) {
    %c0_i32 = arith.constant 0 : i32
    %c0_i32_0 = arith.constant 0 : i32
    return %arg0, %c0_i32 : i32, i32
  }
}

</mosaic_0001>

<llo_original>
// kernel: tpu_custom_call.1
$region0: #{tpu_custom_call.1}
  #allocation0 [shape = 'u32[]', space=smem, size = 0x4, offset = 0x4, fixed_abs, tag = 'smem constant byte address 0x4 - core index']
  #allocation1 [shape = 'u32[144,128]{1,0:T(1,128)}', space=vmem, size = 0x12000, scoped, tag = 'internal scratch']
  %s0 = inlined_call_operand.vmem [shape: s32[16,1], index: 0, kind: input, shape index: {}]
  %s1 = inlined_call_operand.vmem [shape: s32[128,3], index: 1, kind: input, shape index: {}]
  %s2 = inlined_call_operand.hbm [shape: bf16[3,128,128], index: 2, kind: input, shape index: {}]
  %s3 = inlined_call_operand.vmem [shape: f32[1,8,128], index: 3, kind: input, shape index: {}]
  %s4 = inlined_call_operand.vmem [shape: bf16[256,128], index: 4, kind: input, shape index: {}]
  %s5 = inlined_call_operand.hbm [shape: f32[16,128], index: 5, kind: output, shape index: {}]
  %s6 = sld [smem:[#allocation0]]
  $region57: #{tpu_custom_call.1} parent=0
    _
  %s8 = ssub.s32 1, %s6
  %s9 = scalar_select 0, %s8, %s6
  $region1: #{tpu_custom_call.1} parent=0
    #allocation2 [shape = 'u8[98304]{0}', space=vmem, size = 0x18000, scoped, tag = 'input window, operand 2, single buffered']
    #allocation3 [shape = 's32[2]{0}', space=sflag, size = 0x8, scoped, tag = 'scoped memory for tpu_custom_call.1']
    #allocation4 [shape = 's32[2]{0}', space=sflag, size = 0x8, scoped, tag = 'scoped memory for tpu_custom_call.1']
    #allocation5 [shape = 'u8[8192]{0}', space=vmem, size = 0x2000, scoped, tag = 'output window, operand 0']
    %10 = vsyncpa [#allocation3], 0
    %11 = vsyncpa [#allocation4], 0
    %s12 = scalar_lea.sflag [#allocation4], 1
    %13 = vsyncpa %s12, 0
    loop: start=0, step=1, limit=4
    $region2: #{tpu_custom_call.1} parent=1 // loop_pre_header
      _
    $region3: #{tpu_custom_call.1} parent=1 // loop_header
      %s15 = sphi 0, %s19
      %p16 = scmp.ge.s32.totalorder %s15, 4
      %s25 = sphi 0, %s27
      %s28 = sphi 0, %s25
      %s29 = sphi 0, %s28
      %s45 = sphi 0, %s29
      %s51 = sphi 0, %s53
      %s54 = sphi 0, %s51
      %s55 = sphi 0, %s54
      %s71 = sphi 0, %s55
      %s75 = sphi 0, %s75
      %s77 = sphi 0, %s75
      %s78 = sphi 0, %s77
      %s92 = sphi 0, %s78
      %s96 = sphi 0, %s96
      %s98 = sphi 0, %s96
      %s99 = sphi 0, %s98
      %s113 = sphi 0, %s99
      %s117 = sphi 0, %s117
      %s119 = sphi 0, %s117
      %s120 = sphi 0, %s119
      %s134 = sphi 0, %s120
      %s140 = sphi 0, %s142
      %s143 = sphi 0, %s140
      %s144 = sphi 0, %s143
      %s160 = sphi 0, %s144
    $region4: #{tpu_custom_call.1} parent=1 // loop_header_branch
      %18 = sbr.rel (%p16) target = $region8
    $region5: #{tpu_custom_call.1} parent=1 // loop_body
      %s20 = ssub.s32 %s15, 1
      %s21 = ssub.s32 %s15, 2
      %s22 = sadd.s32 %s15, 1
      %s23 = ssub.s32 %s15, %s22
      %p24 = scmp.eq.s32.totalorder %s23, 0
      %s26 = sadd.s32 %s25, 1
      %s27 = scalar_select %p24, %s25, %s26
      %p30 = pneg %p24
      %p31 = scmp.eq.s32.totalorder %s15, 1
      %p32 = por %p30, %p31
      %p33 = scmp.ne.s32.totalorder %s25, %s28
      %p34 = scmp.eq.s32.totalorder %s15, 0
      %p35 = por %p33, %p34
      %p36 = scmp.ne.s32.totalorder %s25, %s28
      %p37 = scmp.eq.s32.totalorder %s20, 1
      %p38 = por %p36, %p37
      %p39 = scmp.ne.s32.totalorder %s28, %s29
      %p40 = scmp.eq.s32.totalorder %s20, 0
      %p41 = por %p39, %p40
      %p42 = scmp.ne.s32.totalorder %s28, %s29
      %p43 = scmp.eq.s32.totalorder %s21, 1
      %p44 = por %p42, %p43
      %p46 = scmp.ne.s32.totalorder %s29, %s45
      %p47 = scmp.eq.s32.totalorder %s21, 0
      %p48 = por %p46, %p47
      %s49 = ssub.s32 %s15, %s22
      %p50 = scmp.eq.s32.totalorder %s49, 0
      %s52 = sadd.s32 %s51, 1
      %s53 = scalar_select %p50, %s51, %s52
      %p56 = pneg %p50
      %p57 = scmp.eq.s32.totalorder %s15, 1
      %p58 = por %p56, %p57
      %p59 = scmp.ne.s32.totalorder %s51, %s54
      %p60 = scmp.eq.s32.totalorder %s15, 0
      %p61 = por %p59, %p60
      %p62 = scmp.ne.s32.totalorder %s51, %s54
      %p63 = scmp.eq.s32.totalorder %s20, 1
      %p64 = por %p62, %p63
      %p65 = scmp.ne.s32.totalorder %s54, %s55
      %p66 = scmp.eq.s32.totalorder %s20, 0
      %p67 = por %p65, %p66
      %p68 = scmp.ne.s32.totalorder %s54, %s55
      %p69 = scmp.eq.s32.totalorder %s21, 1
      %p70 = por %p68, %p69
      %p72 = scmp.ne.s32.totalorder %s55, %s71
      %p73 = scmp.eq.s32.totalorder %s21, 0
      %p74 = por %p72, %p73
      %s76 = sadd.s32 %s75, 1
      %p79 = scmp.eq.s32.totalorder %s15, 1
      %p80 = scmp.ne.s32.totalorder %s75, %s77
      %p81 = scmp.eq.s32.totalorder %s15, 0
      %p82 = por %p80, %p81
      %p83 = scmp.ne.s32.totalorder %s75, %s77
      %p84 = scmp.eq.s32.totalorder %s20, 1
      %p85 = por %p83, %p84
      %p86 = scmp.ne.s32.totalorder %s77, %s78
      %p87 = scmp.eq.s32.totalorder %s20, 0
      %p88 = por %p86, %p87
      %p89 = scmp.ne.s32.totalorder %s77, %s78
      %p90 = scmp.eq.s32.totalorder %s21, 1
      %p91 = por %p89, %p90
      %p93 = scmp.ne.s32.totalorder %s78, %s92
      %p94 = scmp.eq.s32.totalorder %s21, 0
      %p95 = por %p93, %p94
      %s97 = sadd.s32 %s96, 1
      %p100 = scmp.eq.s32.totalorder %s15, 1
      %p101 = scmp.ne.s32.totalorder %s96, %s98
      %p102 = scmp.eq.s32.totalorder %s15, 0
      %p103 = por %p101, %p102
      %p104 = scmp.ne.s32.totalorder %s96, %s98
      %p105 = scmp.eq.s32.totalorder %s20, 1
      %p106 = por %p104, %p105
      %p107 = scmp.ne.s32.totalorder %s98, %s99
      %p108 = scmp.eq.s32.totalorder %s20, 0
      %p109 = por %p107, %p108
      %p110 = scmp.ne.s32.totalorder %s98, %s99
      %p111 = scmp.eq.s32.totalorder %s21, 1
      %p112 = por %p110, %p111
      %p114 = scmp.ne.s32.totalorder %s99, %s113
      %p115 = scmp.eq.s32.totalorder %s21, 0
      %p116 = por %p114, %p115
      %s118 = sadd.s32 %s117, 1
      %p121 = scmp.eq.s32.totalorder %s15, 1
      %p122 = scmp.ne.s32.totalorder %s117, %s119
      %p123 = scmp.eq.s32.totalorder %s15, 0
      %p124 = por %p122, %p123
      %p125 = scmp.ne.s32.totalorder %s117, %s119
      %p126 = scmp.eq.s32.totalorder %s20, 1
      %p127 = por %p125, %p126
      %p128 = scmp.ne.s32.totalorder %s119, %s120
      %p129 = scmp.eq.s32.totalorder %s20, 0
      %p130 = por %p128, %p129
      %p131 = scmp.ne.s32.totalorder %s119, %s120
      %p132 = scmp.eq.s32.totalorder %s21, 1
      %p133 = por %p131, %p132
      %p135 = scmp.ne.s32.totalorder %s120, %s134
      %p136 = scmp.eq.s32.totalorder %s21, 0
      %p137 = por %p135, %p136
      %s138 = ssub.s32 %s15, %s22
      %p139 = scmp.eq.s32.totalorder %s138, 0
      %s141 = sadd.s32 %s140, 1
      %s142 = scalar_select %p139, %s140, %s141
      %p145 = pneg %p139
      %p146 = scmp.eq.s32.totalorder %s15, 1
      %p147 = por %p145, %p146
      %p148 = scmp.ne.s32.totalorder %s140, %s143
      %p149 = scmp.eq.s32.totalorder %s15, 0
      %p150 = por %p148, %p149
      %p151 = scmp.ne.s32.totalorder %s140, %s143
      %p152 = scmp.eq.s32.totalorder %s20, 1
      %p153 = por %p151, %p152
      %p154 = scmp.ne.s32.totalorder %s143, %s144
      %p155 = scmp.eq.s32.totalorder %s20, 0
      %p156 = por %p154, %p155
      %p157 = scmp.ne.s32.totalorder %s143, %s144
      %p158 = scmp.eq.s32.totalorder %s21, 1
      %p159 = por %p157, %p158
      %p161 = scmp.ne.s32.totalorder %s144, %s160
      %p162 = scmp.eq.s32.totalorder %s21, 0
      %p163 = por %p161, %p162
      %p164 = scmp.le.s32.totalorder 1, %s15
      %p165 = scmp.lt.s32.totalorder %s15, 3
      %p166 = pnand %p164, %p165
      %p167 = pneg %p166
      // Predicated region
      $region9: #{tpu_custom_call.1} parent=5 // pred_check
        _
      $region10: #{tpu_custom_call.1} parent=5 // pred_check_branch
        %169 = sbr.rel (%p166) target = $region12
      $region11: #{tpu_custom_call.1} parent=5 // pred_region
        %s170 = ssub.s32 %s15, 1
        // Predicated region
        $region13: #{tpu_custom_call.1} parent=11 // pred_check
          %p171 = pneg %p88
        $region14: #{tpu_custom_call.1} parent=11 // pred_check_branch
          %173 = sbr.rel (%p171) target = $region16
        $region15: #{tpu_custom_call.1} parent=11 // pred_region
          %s175 = ssub.s32 3072, 3072
          %176 = vsyncadd [#allocation3], %s175
          %s177 = sshll.u32 [#allocation2], 4
          %s178 = int_to_ptr.vmem [resolvable:$true] %s177
          %183 = dma.hbm_to_vmem [thread:$0]  %s2, 3072, %s178, [#allocation3], 64, 64, 4
        $region16: #{tpu_custom_call.1} parent=11 // pred_fallthru
          _
        // Predicated region
        $region17: #{tpu_custom_call.1} parent=11 // pred_check
          %p184 = pneg %p109
        $region18: #{tpu_custom_call.1} parent=11 // pred_check_branch
          %186 = sbr.rel (%p184) target = $region20
        $region19: #{tpu_custom_call.1} parent=11 // pred_region
          _
        $region20: #{tpu_custom_call.1} parent=11 // pred_fallthru
          _
        // Predicated region
        $region21: #{tpu_custom_call.1} parent=11 // pred_check
          %p187 = pneg %p130
        $region22: #{tpu_custom_call.1} parent=11 // pred_check_branch
          %189 = sbr.rel (%p187) target = $region24
        $region23: #{tpu_custom_call.1} parent=11 // pred_region
          _
        $region24: #{tpu_custom_call.1} parent=11 // pred_fallthru
          _
      $region12: #{tpu_custom_call.1} parent=5 // pred_fallthru
        _
      %p190 = scmp.lt.s32.totalorder %s15, 2
      // Predicated region
      $region25: #{tpu_custom_call.1} parent=5 // pred_check
        %p191 = pneg %p190
      $region26: #{tpu_custom_call.1} parent=5 // pred_check_branch
        %193 = sbr.rel (%p191) target = $region28
      $region27: #{tpu_custom_call.1} parent=5 // pred_region
        // Predicated region
        $region29: #{tpu_custom_call.1} parent=27 // pred_check
          %p194 = pneg %p35
        $region30: #{tpu_custom_call.1} parent=27 // pred_check_branch
          %196 = sbr.rel (%p194) target = $region32
        $region31: #{tpu_custom_call.1} parent=27 // pred_region
          %p197 = scmp.lt.s32.totalorder %s15, 1
          %s198 = scalar_select %p197, %s15, 1
          %s199 = smul.addr %s198, 8
          %s200 = scalar_lea.vmem %s0, %s199
        $region32: #{tpu_custom_call.1} parent=27 // pred_fallthru
          _
        // Predicated region
        $region33: #{tpu_custom_call.1} parent=27 // pred_check
          %p201 = pneg %p61
        $region34: #{tpu_custom_call.1} parent=27 // pred_check_branch
          %203 = sbr.rel (%p201) target = $region36
        $region35: #{tpu_custom_call.1} parent=27 // pred_region
          %s204 = smul.u32 8, %s15
          %p205 = scmp.lt.s32.totalorder %s204, 15
          %s206 = scalar_select %p205, %s204, 15
          %s207 = smul.addr %s206, 8
          %s208 = scalar_lea.vmem %s1, %s207
          %s209 = smul.u32 8, %s15
        $region36: #{tpu_custom_call.1} parent=27 // pred_fallthru
          _
      $region28: #{tpu_custom_call.1} parent=5 // pred_fallthru
        _
      %p210 = scmp.le.s32.totalorder 1, %s15
      %p211 = scmp.lt.s32.totalorder %s15, 3
      %p212 = pnand %p210, %p211
      %p213 = pneg %p212
      // Predicated region
      $region37: #{tpu_custom_call.1} parent=5 // pred_check
        _
      $region38: #{tpu_custom_call.1} parent=5 // pred_check_branch
        %215 = sbr.rel (%p212) target = $region40
      $region39: #{tpu_custom_call.1} parent=5 // pred_region
        %s216 = ssub.s32 %s15, 1
        // Predicated region
        $region41: #{tpu_custom_call.1} parent=39 // pred_check
          %p217 = pneg %p88
        $region42: #{tpu_custom_call.1} parent=39 // pred_check_branch
          %219 = sbr.rel (%p217) target = $region44
        $region43: #{tpu_custom_call.1} parent=39 // pred_region
          %220 = dma.done [#allocation3], 3072
        $region44: #{tpu_custom_call.1} parent=39 // pred_fallthru
          _
        %p221 = scmp.lt.s32.totalorder %s20, 1
        %s222 = scalar_select %p221, %s20, 1
        %s223 = smul.addr %s222, 8
        %s224 = scalar_lea.vmem %s0, %s223
        %p225 = pneg %p41
        %p226 = pneg %p38
        %s227 = smul.u32 8, %s20
        %p228 = scmp.lt.s32.totalorder %s227, 15
        %s229 = scalar_select %p228, %s227, 15
        %s230 = smul.addr %s229, 8
        %s231 = scalar_lea.vmem %s1, %s230
        %p232 = pneg %p67
        %p233 = pneg %p64
        %p234 = pneg %p88
        %p235 = pneg %p85
        %p236 = pneg %p109
        %p237 = pneg %p106
        %p238 = pneg %p130
        %p239 = pneg %p127
        %p240 = pneg %p156
        %p241 = pneg %p153
        %s242 = sand.u32 %s143, 1
        %s243 = scalar_lea.sflag [#allocation4], %s242
        %s244 = sand.u32 %s143, 1
        %s245 = smul.addr %s244, 8
        %s246 = scalar_lea.vmem [#allocation5], %s245
        %p247 = scmp.lt.s32.totalorder %s20, 1
        %s248 = scalar_select %p247, %s20, 1
        %s249 = smul.addr %s248, 8
        %s250 = scalar_lea.vmem %s0, %s249
        %s251 = smul.u32 8, %s20
        %p252 = scmp.lt.s32.totalorder %s251, 15
        %s253 = scalar_select %p252, %s251, 15
        %s254 = smul.addr %s253, 8
        %s255 = scalar_lea.vmem %s1, %s254
        %s256 = smul.u32 8, %s20
        %v258 = vld [vmem:[%s255] sm:$0xff]
        %v259 = vld [vmem:[%s255 + $0x8] sm:$0xff]
        %v260 = vld [vmem:[%s255 + $0x10] sm:$0xff]
        %v261 = vld [vmem:[%s255 + $0x18] sm:$0xff]
        %v262 = vld [vmem:[%s255 + $0x20] sm:$0xff]
        %v263 = vld [vmem:[%s255 + $0x28] sm:$0xff]
        %v264 = vld [vmem:[%s255 + $0x30] sm:$0xff]
        %v265 = vld [vmem:[%s255 + $0x38] sm:$0xff]
        %v266 = vlaneseq
        %v267 = vand.u32 %v266, 127
        %268 = vset.pattern.permute.xlu0 0
        %269 = vperm.xlu0 %268, %v258
        %v270 = vpop.permute.xlu0 %269
        %271 = vset.pattern.permute.xlu0 0
        %272 = vperm.xlu0 %271, %v259
        %v273 = vpop.permute.xlu0 %272
        %274 = vset.pattern.permute.xlu0 0
        %275 = vperm.xlu0 %274, %v260
        %v276 = vpop.permute.xlu0 %275
        %277 = vset.pattern.permute.xlu0 0
        %278 = vperm.xlu0 %277, %v261
        %v279 = vpop.permute.xlu0 %278
        %280 = vset.pattern.permute.xlu0 0
        %281 = vperm.xlu0 %280, %v262
        %v282 = vpop.permute.xlu0 %281
        %283 = vset.pattern.permute.xlu0 0
        %284 = vperm.xlu0 %283, %v263
        %v285 = vpop.permute.xlu0 %284
        %286 = vset.pattern.permute.xlu0 0
        %287 = vperm.xlu0 %286, %v264
        %v288 = vpop.permute.xlu0 %287
        %289 = vset.pattern.permute.xlu0 0
        %290 = vperm.xlu0 %289, %v265
        %v291 = vpop.permute.xlu0 %290
        %vm292 = vcmp.eq.s32.totalorder %v270, %v267
        %vm293 = vcmp.eq.s32.totalorder %v273, %v267
        %vm294 = vcmp.eq.s32.totalorder %v276, %v267
        %vm295 = vcmp.eq.s32.totalorder %v279, %v267
        %vm296 = vcmp.eq.s32.totalorder %v282, %v267
        %vm297 = vcmp.eq.s32.totalorder %v285, %v267
        %vm298 = vcmp.eq.s32.totalorder %v288, %v267
        %vm299 = vcmp.eq.s32.totalorder %v291, %v267
        %v300 = vsel %vm292, 1, 0
        %v301 = vsel %vm293, 1, 0
        %v302 = vsel %vm294, 1, 0
        %v303 = vsel %vm295, 1, 0
        %v304 = vsel %vm296, 1, 0
        %v305 = vsel %vm297, 1, 0
        %v306 = vsel %vm298, 1, 0
        %v307 = vsel %vm299, 1, 0
        %v308 = vcvt.s32.f32 %v300
        %v309 = vcvt.s32.f32 %v301
        %v310 = vcvt.s32.f32 %v302
        %v311 = vcvt.s32.f32 %v303
        %v312 = vcvt.s32.f32 %v304
        %v313 = vcvt.s32.f32 %v305
        %v314 = vcvt.s32.f32 %v306
        %v315 = vcvt.s32.f32 %v307
        %v316 = vpack.c.bf16 %v309, %v308
        %v317 = vpack.c.bf16 %v311, %v310
        %v318 = vpack.c.bf16 %v313, %v312
        %v319 = vpack.c.bf16 %v315, %v314
        %v320 = vld [vmem:[#allocation2] sm:$0xf]
        %v321 = vld [vmem:[#allocation2 + $0x4] sm:$0xf]
        %v322 = vld [vmem:[#allocation2 + $0x8] sm:$0xf]
        %v323 = vld [vmem:[#allocation2 + $0xc] sm:$0xf]
        %v324 = vld [vmem:[#allocation2 + $0x10] sm:$0xf]
        %v325 = vld [vmem:[#allocation2 + $0x14] sm:$0xf]
        %v326 = vld [vmem:[#allocation2 + $0x18] sm:$0xf]
        %v327 = vld [vmem:[#allocation2 + $0x1c] sm:$0xf]
        %v328 = vld [vmem:[#allocation2 + $0x20] sm:$0xf]
        %v329 = vld [vmem:[#allocation2 + $0x24] sm:$0xf]
        %v330 = vld [vmem:[#allocation2 + $0x28] sm:$0xf]
        %v331 = vld [vmem:[#allocation2 + $0x2c] sm:$0xf]
        %v332 = vld [vmem:[#allocation2 + $0x30] sm:$0xf]
        %v333 = vld [vmem:[#allocation2 + $0x34] sm:$0xf]
        %v334 = vld [vmem:[#allocation2 + $0x38] sm:$0xf]
        %v335 = vld [vmem:[#allocation2 + $0x3c] sm:$0xf]
        %336 = vset.pattern.permute.xlu0 1
        %337 = vperm.xlu0 %336, %v258
        %v338 = vpop.permute.xlu0 %337
        %339 = vset.pattern.permute.xlu0 1
        %340 = vperm.xlu0 %339, %v259
        %v341 = vpop.permute.xlu0 %340
        %342 = vset.pattern.permute.xlu0 1
        %343 = vperm.xlu0 %342, %v260
        %v344 = vpop.permute.xlu0 %343
        %345 = vset.pattern.permute.xlu0 1
        %346 = vperm.xlu0 %345, %v261
        %v347 = vpop.permute.xlu0 %346
        %348 = vset.pattern.permute.xlu0 1
        %349 = vperm.xlu0 %348, %v262
        %v350 = vpop.permute.xlu0 %349
        %351 = vset.pattern.permute.xlu0 1
        %352 = vperm.xlu0 %351, %v263
        %v353 = vpop.permute.xlu0 %352
        %354 = vset.pattern.permute.xlu0 1
        %355 = vperm.xlu0 %354, %v264
        %v356 = vpop.permute.xlu0 %355
        %357 = vset.pattern.permute.xlu0 1
        %358 = vperm.xlu0 %357, %v265
        %v359 = vpop.permute.xlu0 %358
        %vm360 = vcmp.eq.s32.totalorder %v338, %v267
        %vm361 = vcmp.eq.s32.totalorder %v341, %v267
        %vm362 = vcmp.eq.s32.totalorder %v344, %v267
        %vm363 = vcmp.eq.s32.totalorder %v347, %v267
        %vm364 = vcmp.eq.s32.totalorder %v350, %v267
        %vm365 = vcmp.eq.s32.totalorder %v353, %v267
        %vm366 = vcmp.eq.s32.totalorder %v356, %v267
        %vm367 = vcmp.eq.s32.totalorder %v359, %v267
        %v368 = vsel %vm360, 1, 0
        %v369 = vsel %vm361, 1, 0
        %v370 = vsel %vm362, 1, 0
        %v371 = vsel %vm363, 1, 0
        %v372 = vsel %vm364, 1, 0
        %v373 = vsel %vm365, 1, 0
        %v374 = vsel %vm366, 1, 0
        %v375 = vsel %vm367, 1, 0
        %v376 = vcvt.s32.f32 %v368
        %v377 = vcvt.s32.f32 %v369
        %v378 = vcvt.s32.f32 %v370
        %v379 = vcvt.s32.f32 %v371
        %v380 = vcvt.s32.f32 %v372
        %v381 = vcvt.s32.f32 %v373
        %v382 = vcvt.s32.f32 %v374
        %v383 = vcvt.s32.f32 %v375
        %v384 = vpack.c.bf16 %v377, %v376
        %v385 = vpack.c.bf16 %v379, %v378
        %v386 = vpack.c.bf16 %v381, %v380
        %v387 = vpack.c.bf16 %v383, %v382
        %s388 = scalar_lea.vmem [#allocation2], 64
        %v389 = vld [vmem:[%s388] sm:$0xf]
        %v390 = vld [vmem:[%s388 + $0x4] sm:$0xf]
        %v391 = vld [vmem:[%s388 + $0x8] sm:$0xf]
        %v392 = vld [vmem:[%s388 + $0xc] sm:$0xf]
        %v393 = vld [vmem:[%s388 + $0x10] sm:$0xf]
        %v394 = vld [vmem:[%s388 + $0x14] sm:$0xf]
        %v395 = vld [vmem:[%s388 + $0x18] sm:$0xf]
        %v396 = vld [vmem:[%s388 + $0x1c] sm:$0xf]
        %v397 = vld [vmem:[%s388 + $0x20] sm:$0xf]
        %v398 = vld [vmem:[%s388 + $0x24] sm:$0xf]
        %v399 = vld [vmem:[%s388 + $0x28] sm:$0xf]
        %v400 = vld [vmem:[%s388 + $0x2c] sm:$0xf]
        %v401 = vld [vmem:[%s388 + $0x30] sm:$0xf]
        %v402 = vld [vmem:[%s388 + $0x34] sm:$0xf]
        %v403 = vld [vmem:[%s388 + $0x38] sm:$0xf]
        %v404 = vld [vmem:[%s388 + $0x3c] sm:$0xf]
        %v421 = vunpack.c.l.b16 %v389
        %v422 = vunpack.c.l.b16 %v390
        %v423 = vunpack.c.l.b16 %v391
        %v424 = vunpack.c.l.b16 %v392
        %v425 = vunpack.c.l.b16 %v393
        %v426 = vunpack.c.l.b16 %v394
        %v427 = vunpack.c.l.b16 %v395
        %v428 = vunpack.c.l.b16 %v396
        %v429 = vunpack.c.l.b16 %v397
        %v430 = vunpack.c.l.b16 %v398
        %v431 = vunpack.c.l.b16 %v399
        %v432 = vunpack.c.l.b16 %v400
        %v433 = vunpack.c.l.b16 %v401
        %v434 = vunpack.c.l.b16 %v402
        %v435 = vunpack.c.l.b16 %v403
        %v436 = vunpack.c.l.b16 %v404
        %v437 = vpack.c.b16 %v422, %v421
        %v438 = vpack.c.b16 %v424, %v423
        %v439 = vpack.c.b16 %v426, %v425
        %v440 = vpack.c.b16 %v428, %v427
        %v441 = vpack.c.b16 %v430, %v429
        %v442 = vpack.c.b16 %v432, %v431
        %v443 = vpack.c.b16 %v434, %v433
        %v444 = vpack.c.b16 %v436, %v435
        %453 = vmatprep.subr.bf16.mxu0 0
        %454 = vmatpush1.bf16.msra.mxu0 %v437
        %455 = vmatprep.subr.bf16.mxu0 0
        %456 = vmatpush1.bf16.msra.mxu0 %v438
        %457 = vmatprep.subr.bf16.mxu0 0
        %458 = vmatpush1.bf16.msra.mxu0 %v439
        %459 = vmatprep.subr.bf16.mxu0 0
        %460 = vmatpush1.bf16.msra.mxu0 %v440
        %461 = vmatprep.subr.bf16.mxu0 0
        %462 = vmatpush1.bf16.msra.mxu0 %v441
        %463 = vmatprep.subr.bf16.mxu0 0
        %464 = vmatpush1.bf16.msra.mxu0 %v442
        %465 = vmatprep.subr.bf16.mxu0 0
        %466 = vmatpush1.bf16.msra.mxu0 %v443
        %467 = vmatprep.subr.bf16.mxu0 0
        %468 = vmatpush1.bf16.msra.mxu0 %v444
        %469 = vmatprep.subr.bf16.mxu0 0
        %470 = vmatpush1.bf16.msra.mxu0 0
        %471 = vmatprep.subr.bf16.mxu0 0
        %472 = vmatpush1.bf16.msra.mxu0 0
        %473 = vmatprep.subr.bf16.mxu0 0
        %474 = vmatpush1.bf16.msra.mxu0 0
        %475 = vmatprep.subr.bf16.mxu0 0
        %476 = vmatpush1.bf16.msra.mxu0 0
        %477 = vmatprep.subr.bf16.mxu0 0
        %478 = vmatpush1.bf16.msra.mxu0 0
        %479 = vmatprep.subr.bf16.mxu0 0
        %480 = vmatpush1.bf16.msra.mxu0 0
        %481 = vmatprep.subr.bf16.mxu0 0
        %482 = vmatpush1.bf16.msra.mxu0 0
        %483 = vmatprep.subr.bf16.mxu0 0
        %484 = vmatpush1.bf16.msra.mxu0 0
        %485 = vmatprep.mubr.bf16.mxu0 0
        %486 = vmatmul.mubr.bf16.gmra.mrb[0].mxu0 %v384
        %v487 = vpop.f32.mrb[0].mxu0
        %v488 = vadd.f32 0.0, %v487
        %v489 = vpop.f32.mrb[0].mxu0
        %v490 = vpop.f32.mrb[0].mxu0
        %v491 = vadd.f32 0.0, %v490
        %v492 = vpop.f32.mrb[0].mxu0
        %493 = vmatprep.mubr.bf16.mxu0 0
        %494 = vmatmul.mubr.bf16.gmra.mrb[0].mxu0 %v385
        %v495 = vpop.f32.mrb[0].mxu0
        %v496 = vadd.f32 0.0, %v495
        %v497 = vpop.f32.mrb[0].mxu0
        %v498 = vpop.f32.mrb[0].mxu0
        %v499 = vadd.f32 0.0, %v498
        %v500 = vpop.f32.mrb[0].mxu0
        %501 = vmatprep.mubr.bf16.mxu0 0
        %502 = vmatmul.mubr.bf16.gmra.mrb[0].mxu0 %v386
        %v503 = vpop.f32.mrb[0].mxu0
        %v504 = vadd.f32 0.0, %v503
        %v505 = vpop.f32.mrb[0].mxu0
        %v506 = vpop.f32.mrb[0].mxu0
        %v507 = vadd.f32 0.0, %v506
        %v508 = vpop.f32.mrb[0].mxu0
        %509 = vmatprep.mubr.bf16.mxu0 0
        %510 = vmatmul.mubr.bf16.gmra.mrb[0].mxu0 %v387
        %v511 = vpop.f32.mrb[0].mxu0
        %v512 = vadd.f32 0.0, %v511
        %v513 = vpop.f32.mrb[0].mxu0
        %v514 = vpop.f32.mrb[0].mxu0
        %v515 = vadd.f32 0.0, %v514
        %v516 = vpop.f32.mrb[0].mxu0
        %517 = vdwg.mxu0
        %v534 = vunpack.c.l.b16 %v320
        %v535 = vunpack.c.l.b16 %v321
        %v536 = vunpack.c.l.b16 %v322
        %v537 = vunpack.c.l.b16 %v323
        %v538 = vunpack.c.l.b16 %v324
        %v539 = vunpack.c.l.b16 %v325
        %v540 = vunpack.c.l.b16 %v326
        %v541 = vunpack.c.l.b16 %v327
        %v542 = vunpack.c.l.b16 %v328
        %v543 = vunpack.c.l.b16 %v329
        %v544 = vunpack.c.l.b16 %v330
        %v545 = vunpack.c.l.b16 %v331
        %v546 = vunpack.c.l.b16 %v332
        %v547 = vunpack.c.l.b16 %v333
        %v548 = vunpack.c.l.b16 %v334
        %v549 = vunpack.c.l.b16 %v335
        %v550 = vpack.c.b16 %v535, %v534
        %v551 = vpack.c.b16 %v537, %v536
        %v552 = vpack.c.b16 %v539, %v538
        %v553 = vpack.c.b16 %v541, %v540
        %v554 = vpack.c.b16 %v543, %v542
        %v555 = vpack.c.b16 %v545, %v544
        %v556 = vpack.c.b16 %v547, %v546
        %v557 = vpack.c.b16 %v549, %v548
        %566 = vmatprep.subr.bf16.mxu0 0
        %567 = vmatpush1.bf16.msra.mxu0 %v550
        %568 = vmatprep.subr.bf16.mxu0 0
        %569 = vmatpush1.bf16.msra.mxu0 %v551
        %570 = vmatprep.subr.bf16.mxu0 0
        %571 = vmatpush1.bf16.msra.mxu0 %v552
        %572 = vmatprep.subr.bf16.mxu0 0
        %573 = vmatpush1.bf16.msra.mxu0 %v553
        %574 = vmatprep.subr.bf16.mxu0 0
        %575 = vmatpush1.bf16.msra.mxu0 %v554
        %576 = vmatprep.subr.bf16.mxu0 0
        %577 = vmatpush1.bf16.msra.mxu0 %v555
        %578 = vmatprep.subr.bf16.mxu0 0
        %579 = vmatpush1.bf16.msra.mxu0 %v556
        %580 = vmatprep.subr.bf16.mxu0 0
        %581 = vmatpush1.bf16.msra.mxu0 %v557
        %582 = vmatprep.subr.bf16.mxu0 0
        %583 = vmatpush1.bf16.msra.mxu0 0
        %584 = vmatprep.subr.bf16.mxu0 0
        %585 = vmatpush1.bf16.msra.mxu0 0
        %586 = vmatprep.subr.bf16.mxu0 0
        %587 = vmatpush1.bf16.msra.mxu0 0
        %588 = vmatprep.subr.bf16.mxu0 0
        %589 = vmatpush1.bf16.msra.mxu0 0
        %590 = vmatprep.subr.bf16.mxu0 0
        %591 = vmatpush1.bf16.msra.mxu0 0
        %592 = vmatprep.subr.bf16.mxu0 0
        %593 = vmatpush1.bf16.msra.mxu0 0
        %594 = vmatprep.subr.bf16.mxu0 0
        %595 = vmatpush1.bf16.msra.mxu0 0
        %596 = vmatprep.subr.bf16.mxu0 0
        %597 = vmatpush1.bf16.msra.mxu0 0
        %598 = vmatprep.mubr.bf16.mxu0 0
        %599 = vmatmul.mubr.bf16.gmra.mrb[0].mxu0 %v316
        %v600 = vpop.f32.mrb[0].mxu0
        %v601 = vadd.f32 %v488, %v600
        %v602 = vpop.f32.mrb[0].mxu0
        %v603 = vpop.f32.mrb[0].mxu0
        %v604 = vadd.f32 %v491, %v603
        %v605 = vpop.f32.mrb[0].mxu0
        %606 = vmatprep.mubr.bf16.mxu0 0
        %607 = vmatmul.mubr.bf16.gmra.mrb[0].mxu0 %v317
        %v608 = vpop.f32.mrb[0].mxu0
        %v609 = vadd.f32 %v496, %v608
        %v610 = vpop.f32.mrb[0].mxu0
        %v611 = vpop.f32.mrb[0].mxu0
        %v612 = vadd.f32 %v499, %v611
        %v613 = vpop.f32.mrb[0].mxu0
        %614 = vmatprep.mubr.bf16.mxu0 0
        %615 = vmatmul.mubr.bf16.gmra.mrb[0].mxu0 %v318
        %v616 = vpop.f32.mrb[0].mxu0
        %v617 = vadd.f32 %v504, %v616
        %v618 = vpop.f32.mrb[0].mxu0
        %v619 = vpop.f32.mrb[0].mxu0
        %v620 = vadd.f32 %v507, %v619
        %v621 = vpop.f32.mrb[0].mxu0
        %622 = vmatprep.mubr.bf16.mxu0 0
        %623 = vmatmul.mubr.bf16.gmra.mrb[0].mxu0 %v319
        %v624 = vpop.f32.mrb[0].mxu0
        %v625 = vadd.f32 %v512, %v624
        %v626 = vpop.f32.mrb[0].mxu0
        %v627 = vpop.f32.mrb[0].mxu0
        %v628 = vadd.f32 %v515, %v627
        %v629 = vpop.f32.mrb[0].mxu0
        %630 = vdwg.mxu0
        %631 = vset.pattern.permute.xlu0 2
        %632 = vperm.xlu0 %631, %v258
        %v633 = vpop.permute.xlu0 %632
        %634 = vset.pattern.permute.xlu0 2
        %635 = vperm.xlu0 %634, %v259
        %v636 = vpop.permute.xlu0 %635
        %637 = vset.pattern.permute.xlu0 2
        %638 = vperm.xlu0 %637, %v260
        %v639 = vpop.permute.xlu0 %638
        %640 = vset.pattern.permute.xlu0 2
        %641 = vperm.xlu0 %640, %v261
        %v642 = vpop.permute.xlu0 %641
        %643 = vset.pattern.permute.xlu0 2
        %644 = vperm.xlu0 %643, %v262
        %v645 = vpop.permute.xlu0 %644
        %646 = vset.pattern.permute.xlu0 2
        %647 = vperm.xlu0 %646, %v263
        %v648 = vpop.permute.xlu0 %647
        %649 = vset.pattern.permute.xlu0 2
        %650 = vperm.xlu0 %649, %v264
        %v651 = vpop.permute.xlu0 %650
        %652 = vset.pattern.permute.xlu0 2
        %653 = vperm.xlu0 %652, %v265
        %v654 = vpop.permute.xlu0 %653
        %vm655 = vcmp.eq.s32.totalorder %v633, %v267
        %vm656 = vcmp.eq.s32.totalorder %v636, %v267
        %vm657 = vcmp.eq.s32.totalorder %v639, %v267
        %vm658 = vcmp.eq.s32.totalorder %v642, %v267
        %vm659 = vcmp.eq.s32.totalorder %v645, %v267
        %vm660 = vcmp.eq.s32.totalorder %v648, %v267
        %vm661 = vcmp.eq.s32.totalorder %v651, %v267
        %vm662 = vcmp.eq.s32.totalorder %v654, %v267
        %v663 = vsel %vm655, 1, 0
        %v664 = vsel %vm656, 1, 0
        %v665 = vsel %vm657, 1, 0
        %v666 = vsel %vm658, 1, 0
        %v667 = vsel %vm659, 1, 0
        %v668 = vsel %vm660, 1, 0
        %v669 = vsel %vm661, 1, 0
        %v670 = vsel %vm662, 1, 0
        %v671 = vcvt.s32.f32 %v663
        %v672 = vcvt.s32.f32 %v664
        %v673 = vcvt.s32.f32 %v665
        %v674 = vcvt.s32.f32 %v666
        %v675 = vcvt.s32.f32 %v667
        %v676 = vcvt.s32.f32 %v668
        %v677 = vcvt.s32.f32 %v669
        %v678 = vcvt.s32.f32 %v670
        %v679 = vpack.c.bf16 %v672, %v671
        %v680 = vpack.c.bf16 %v674, %v673
        %v681 = vpack.c.bf16 %v676, %v675
        %v682 = vpack.c.bf16 %v678, %v677
        %s683 = scalar_lea.vmem [#allocation2], 128
        %v684 = vld [vmem:[%s683] sm:$0xf]
        %v685 = vld [vmem:[%s683 + $0x4] sm:$0xf]
        %v686 = vld [vmem:[%s683 + $0x8] sm:$0xf]
        %v687 = vld [vmem:[%s683 + $0xc] sm:$0xf]
        %v688 = vld [vmem:[%s683 + $0x10] sm:$0xf]
        %v689 = vld [vmem:[%s683 + $0x14] sm:$0xf]
        %v690 = vld [vmem:[%s683 + $0x18] sm:$0xf]
        %v691 = vld [vmem:[%s683 + $0x1c] sm:$0xf]
        %v692 = vld [vmem:[%s683 + $0x20] sm:$0xf]
        %v693 = vld [vmem:[%s683 + $0x24] sm:$0xf]
        %v694 = vld [vmem:[%s683 + $0x28] sm:$0xf]
        %v695 = vld [vmem:[%s683 + $0x2c] sm:$0xf]
        %v696 = vld [vmem:[%s683 + $0x30] sm:$0xf]
        %v697 = vld [vmem:[%s683 + $0x34] sm:$0xf]
        %v698 = vld [vmem:[%s683 + $0x38] sm:$0xf]
        %v699 = vld [vmem:[%s683 + $0x3c] sm:$0xf]
        %v716 = vunpack.c.l.b16 %v684
        %v717 = vunpack.c.l.b16 %v685
        %v718 = vunpack.c.l.b16 %v686
        %v719 = vunpack.c.l.b16 %v687
        %v720 = vunpack.c.l.b16 %v688
        %v721 = vunpack.c.l.b16 %v689
        %v722 = vunpack.c.l.b16 %v690
        %v723 = vunpack.c.l.b16 %v691
        %v724 = vunpack.c.l.b16 %v692
        %v725 = vunpack.c.l.b16 %v693
        %v726 = vunpack.c.l.b16 %v694
        %v727 = vunpack.c.l.b16 %v695
        %v728 = vunpack.c.l.b16 %v696
        %v729 = vunpack.c.l.b16 %v697
        %v730 = vunpack.c.l.b16 %v698
        %v731 = vunpack.c.l.b16 %v699
        %v732 = vpack.c.b16 %v717, %v716
        %v733 = vpack.c.b16 %v719, %v718
        %v734 = vpack.c.b16 %v721, %v720
        %v735 = vpack.c.b16 %v723, %v722
        %v736 = vpack.c.b16 %v725, %v724
        %v737 = vpack.c.b16 %v727, %v726
        %v738 = vpack.c.b16 %v729, %v728
        %v739 = vpack.c.b16 %v731, %v730
        %748 = vmatprep.subr.bf16.mxu0 0
        %749 = vmatpush1.bf16.msra.mxu0 %v732
        %750 = vmatprep.subr.bf16.mxu0 0
        %751 = vmatpush1.bf16.msra.mxu0 %v733
        %752 = vmatprep.subr.bf16.mxu0 0
        %753 = vmatpush1.bf16.msra.mxu0 %v734
        %754 = vmatprep.subr.bf16.mxu0 0
        %755 = vmatpush1.bf16.msra.mxu0 %v735
        %756 = vmatprep.subr.bf16.mxu0 0
        %757 = vmatpush1.bf16.msra.mxu0 %v736
        %758 = vmatprep.subr.bf16.mxu0 0
        %759 = vmatpush1.bf16.msra.mxu0 %v737
        %760 = vmatprep.subr.bf16.mxu0 0
        %761 = vmatpush1.bf16.msra.mxu0 %v738
        %762 = vmatprep.subr.bf16.mxu0 0
        %763 = vmatpush1.bf16.msra.mxu0 %v739
        %764 = vmatprep.subr.bf16.mxu0 0
        %765 = vmatpush1.bf16.msra.mxu0 0
        %766 = vmatprep.subr.bf16.mxu0 0
        %767 = vmatpush1.bf16.msra.mxu0 0
        %768 = vmatprep.subr.bf16.mxu0 0
        %769 = vmatpush1.bf16.msra.mxu0 0
        %770 = vmatprep.subr.bf16.mxu0 0
        %771 = vmatpush1.bf16.msra.mxu0 0
        %772 = vmatprep.subr.bf16.mxu0 0
        %773 = vmatpush1.bf16.msra.mxu0 0
        %774 = vmatprep.subr.bf16.mxu0 0
        %775 = vmatpush1.bf16.msra.mxu0 0
        %776 = vmatprep.subr.bf16.mxu0 0
        %777 = vmatpush1.bf16.msra.mxu0 0
        %778 = vmatprep.subr.bf16.mxu0 0
        %779 = vmatpush1.bf16.msra.mxu0 0
        %780 = vmatprep.mubr.bf16.mxu0 0
        %781 = vmatmul.mubr.bf16.gmra.mrb[0].mxu0 %v679
        %v782 = vpop.f32.mrb[0].mxu0
        %v783 = vadd.f32 0.0, %v782
        %v784 = vpop.f32.mrb[0].mxu0
        %v785 = vpop.f32.mrb[0].mxu0
        %v786 = vadd.f32 0.0, %v785
        %v787 = vpop.f32.mrb[0].mxu0
        %788 = vmatprep.mubr.bf16.mxu0 0
        %789 = vmatmul.mubr.bf16.gmra.mrb[0].mxu0 %v680
        %v790 = vpop.f32.mrb[0].mxu0
        %v791 = vadd.f32 0.0, %v790
        %v792 = vpop.f32.mrb[0].mxu0
        %v793 = vpop.f32.mrb[0].mxu0
        %v794 = vadd.f32 0.0, %v793
        %v795 = vpop.f32.mrb[0].mxu0
        %796 = vmatprep.mubr.bf16.mxu0 0
        %797 = vmatmul.mubr.bf16.gmra.mrb[0].mxu0 %v681
        %v798 = vpop.f32.mrb[0].mxu0
        %v799 = vadd.f32 0.0, %v798
        %v800 = vpop.f32.mrb[0].mxu0
        %v801 = vpop.f32.mrb[0].mxu0
        %v802 = vadd.f32 0.0, %v801
        %v803 = vpop.f32.mrb[0].mxu0
        %804 = vmatprep.mubr.bf16.mxu0 0
        %805 = vmatmul.mubr.bf16.gmra.mrb[0].mxu0 %v682
        %v806 = vpop.f32.mrb[0].mxu0
        %v807 = vadd.f32 0.0, %v806
        %v808 = vpop.f32.mrb[0].mxu0
        %v809 = vpop.f32.mrb[0].mxu0
        %v810 = vadd.f32 0.0, %v809
        %v811 = vpop.f32.mrb[0].mxu0
        %812 = vdwg.mxu0
        %v813 = vadd.f32 %v601, %v783
        %v814 = vadd.f32 %v604, %v786
        %v815 = vadd.f32 %v609, %v791
        %v816 = vadd.f32 %v612, %v794
        %v817 = vadd.f32 %v617, %v799
        %v818 = vadd.f32 %v620, %v802
        %v819 = vadd.f32 %v625, %v807
        %v820 = vadd.f32 %v628, %v810
        %v821 = vld [vmem:[%s3] sm:$0xff]
        %v822 = vadd.f32 %v813, %v821
        %v823 = vadd.f32 %v814, %v821
        %v824 = vadd.f32 %v815, %v821
        %v825 = vadd.f32 %v816, %v821
        %v826 = vadd.f32 %v817, %v821
        %v827 = vadd.f32 %v818, %v821
        %v828 = vadd.f32 %v819, %v821
        %v829 = vadd.f32 %v820, %v821
        %v830 = vrot.slane %v822, 4
        %v831 = vmax.f32 %v822, %v830
        %v832 = vrot.slane %v831, 2
        %v833 = vmax.f32 %v831, %v832
        %v834 = vrot.slane %v833, 1
        %v835 = vmax.f32 %v833, %v834
        %v836 = vrot.slane %v823, 4
        %v837 = vmax.f32 %v823, %v836
        %v838 = vrot.slane %v837, 2
        %v839 = vmax.f32 %v837, %v838
        %v840 = vrot.slane %v839, 1
        %v841 = vmax.f32 %v839, %v840
        %v842 = vrot.slane %v824, 4
        %v843 = vmax.f32 %v824, %v842
        %v844 = vrot.slane %v843, 2
        %v845 = vmax.f32 %v843, %v844
        %v846 = vrot.slane %v845, 1
        %v847 = vmax.f32 %v845, %v846
        %v848 = vrot.slane %v825, 4
        %v849 = vmax.f32 %v825, %v848
        %v850 = vrot.slane %v849, 2
        %v851 = vmax.f32 %v849, %v850
        %v852 = vrot.slane %v851, 1
        %v853 = vmax.f32 %v851, %v852
        %v854 = vrot.slane %v826, 4
        %v855 = vmax.f32 %v826, %v854
        %v856 = vrot.slane %v855, 2
        %v857 = vmax.f32 %v855, %v856
        %v858 = vrot.slane %v857, 1
        %v859 = vmax.f32 %v857, %v858
        %v860 = vrot.slane %v827, 4
        %v861 = vmax.f32 %v827, %v860
        %v862 = vrot.slane %v861, 2
        %v863 = vmax.f32 %v861, %v862
        %v864 = vrot.slane %v863, 1
        %v865 = vmax.f32 %v863, %v864
        %v866 = vrot.slane %v828, 4
        %v867 = vmax.f32 %v828, %v866
        %v868 = vrot.slane %v867, 2
        %v869 = vmax.f32 %v867, %v868
        %v870 = vrot.slane %v869, 1
        %v871 = vmax.f32 %v869, %v870
        %v872 = vrot.slane %v829, 4
        %v873 = vmax.f32 %v829, %v872
        %v874 = vrot.slane %v873, 2
        %v875 = vmax.f32 %v873, %v874
        %v876 = vrot.slane %v875, 1
        %v877 = vmax.f32 %v875, %v876
        %v878 = vmax.f32 %v835, 0.0
        %v879 = vmax.f32 %v841, 0.0
        %v880 = vmax.f32 %v847, 0.0
        %v881 = vmax.f32 %v853, 0.0
        %v882 = vmax.f32 %v859, 0.0
        %v883 = vmax.f32 %v865, 0.0
        %v884 = vmax.f32 %v871, 0.0
        %v885 = vmax.f32 %v877, 0.0
        %v886 = vld [vmem:[%s250] sm:$0xff]
        %887 = vset.pattern.permute.xlu0 0
        %888 = vperm.xlu0 %887, %v886
        %v889 = vpop.permute.xlu0 %888
        %vm890 = vcmp.eq.s32.totalorder %v889, %v267
        %v891 = vsel %vm890, 1, 0
        %v892 = vcvt.s32.f32 %v891
        %v893 = vpack.c.bf16 %v892, %v892
        %v894 = vpack.c.bf16 %v878, %v878
        %v895 = vpack.c.bf16 %v879, %v879
        %v896 = vpack.c.bf16 %v880, %v880
        %v897 = vpack.c.bf16 %v881, %v881
        %v898 = vpack.c.bf16 %v882, %v882
        %v899 = vpack.c.bf16 %v883, %v883
        %v900 = vpack.c.bf16 %v884, %v884
        %v901 = vpack.c.bf16 %v885, %v885
        %v910 = vunpack.c.l.b16 %v894
        %v911 = vunpack.c.l.b16 %v895
        %v912 = vunpack.c.l.b16 %v896
        %v913 = vunpack.c.l.b16 %v897
        %v914 = vunpack.c.l.b16 %v898
        %v915 = vunpack.c.l.b16 %v899
        %v916 = vunpack.c.l.b16 %v900
        %v917 = vunpack.c.l.b16 %v901
        %vm918 = vcmask 1041409
        %v919 = vsel %vm918, %v911, %v910
        %vm920 = vcmask 1042434
        %v921 = vsel %vm920, %v912, %v919
        %vm922 = vcmask 1043459
        %v923 = vsel %vm922, %v913, %v921
        %vm924 = vcmask 1044484
        %v925 = vsel %vm924, %v914, %v923
        %vm926 = vcmask 1045509
        %v927 = vsel %vm926, %v915, %v925
        %vm928 = vcmask 1046534
        %v929 = vsel %vm928, %v916, %v927
        %vm930 = vcmask 1047559
        %v931 = vsel %vm930, %v917, %v929
        %v932 = vpack.c.b16 %v931, %v931
        %v934 = vld [vmem:[%s4] sm:$0xf]
        %v935 = vld [vmem:[%s4 + $0x4] sm:$0xf]
        %v936 = vld [vmem:[%s4 + $0x8] sm:$0xf]
        %v937 = vld [vmem:[%s4 + $0xc] sm:$0xf]
        %v938 = vld [vmem:[%s4 + $0x10] sm:$0xf]
        %v939 = vld [vmem:[%s4 + $0x14] sm:$0xf]
        %v940 = vld [vmem:[%s4 + $0x18] sm:$0xf]
        %v941 = vld [vmem:[%s4 + $0x1c] sm:$0xf]
        %v942 = vld [vmem:[%s4 + $0x20] sm:$0xf]
        %v943 = vld [vmem:[%s4 + $0x24] sm:$0xf]
        %v944 = vld [vmem:[%s4 + $0x28] sm:$0xf]
        %v945 = vld [vmem:[%s4 + $0x2c] sm:$0xf]
        %v946 = vld [vmem:[%s4 + $0x30] sm:$0xf]
        %v947 = vld [vmem:[%s4 + $0x34] sm:$0xf]
        %v948 = vld [vmem:[%s4 + $0x38] sm:$0xf]
        %v949 = vld [vmem:[%s4 + $0x3c] sm:$0xf]
        %v950 = vld [vmem:[%s4 + $0x40] sm:$0xf]
        %v951 = vld [vmem:[%s4 + $0x44] sm:$0xf]
        %v952 = vld [vmem:[%s4 + $0x48] sm:$0xf]
        %v953 = vld [vmem:[%s4 + $0x4c] sm:$0xf]
        %v954 = vld [vmem:[%s4 + $0x50] sm:$0xf]
        %v955 = vld [vmem:[%s4 + $0x54] sm:$0xf]
        %v956 = vld [vmem:[%s4 + $0x58] sm:$0xf]
        %v957 = vld [vmem:[%s4 + $0x5c] sm:$0xf]
        %v958 = vld [vmem:[%s4 + $0x60] sm:$0xf]
        %v959 = vld [vmem:[%s4 + $0x64] sm:$0xf]
        %v960 = vld [vmem:[%s4 + $0x68] sm:$0xf]
        %v961 = vld [vmem:[%s4 + $0x6c] sm:$0xf]
        %v962 = vld [vmem:[%s4 + $0x70] sm:$0xf]
        %v963 = vld [vmem:[%s4 + $0x74] sm:$0xf]
        %v964 = vld [vmem:[%s4 + $0x78] sm:$0xf]
        %v965 = vld [vmem:[%s4 + $0x7c] sm:$0xf]
        %v998 = vunpack.c.l.b16 %v934
        %v999 = vunpack.c.l.b16 %v935
        %v1000 = vunpack.c.l.b16 %v936
        %v1001 = vunpack.c.l.b16 %v937
        %v1002 = vunpack.c.l.b16 %v938
        %v1003 = vunpack.c.l.b16 %v939
        %v1004 = vunpack.c.l.b16 %v940
        %v1005 = vunpack.c.l.b16 %v941
        %v1006 = vunpack.c.l.b16 %v942
        %v1007 = vunpack.c.l.b16 %v943
        %v1008 = vunpack.c.l.b16 %v944
        %v1009 = vunpack.c.l.b16 %v945
        %v1010 = vunpack.c.l.b16 %v946
        %v1011 = vunpack.c.l.b16 %v947
        %v1012 = vunpack.c.l.b16 %v948
        %v1013 = vunpack.c.l.b16 %v949
        %v1014 = vunpack.c.l.b16 %v950
        %v1015 = vunpack.c.l.b16 %v951
        %v1016 = vunpack.c.l.b16 %v952
        %v1017 = vunpack.c.l.b16 %v953
        %v1018 = vunpack.c.l.b16 %v954
        %v1019 = vunpack.c.l.b16 %v955
        %v1020 = vunpack.c.l.b16 %v956
        %v1021 = vunpack.c.l.b16 %v957
        %v1022 = vunpack.c.l.b16 %v958
        %v1023 = vunpack.c.l.b16 %v959
        %v1024 = vunpack.c.l.b16 %v960
        %v1025 = vunpack.c.l.b16 %v961
        %v1026 = vunpack.c.l.b16 %v962
        %v1027 = vunpack.c.l.b16 %v963
        %v1028 = vunpack.c.l.b16 %v964
        %v1029 = vunpack.c.l.b16 %v965
        %v1030 = vpack.c.b16 %v999, %v998
        %v1031 = vpack.c.b16 %v1001, %v1000
        %v1032 = vpack.c.b16 %v1003, %v1002
        %v1033 = vpack.c.b16 %v1005, %v1004
        %v1034 = vpack.c.b16 %v1007, %v1006
        %v1035 = vpack.c.b16 %v1009, %v1008
        %v1036 = vpack.c.b16 %v1011, %v1010
        %v1037 = vpack.c.b16 %v1013, %v1012
        %v1038 = vpack.c.b16 %v1015, %v1014
        %v1039 = vpack.c.b16 %v1017, %v1016
        %v1040 = vpack.c.b16 %v1019, %v1018
        %v1041 = vpack.c.b16 %v1021, %v1020
        %v1042 = vpack.c.b16 %v1023, %v1022
        %v1043 = vpack.c.b16 %v1025, %v1024
        %v1044 = vpack.c.b16 %v1027, %v1026
        %v1045 = vpack.c.b16 %v1029, %v1028
        %1062 = vmatprep.subr.bf16.mxu0 0
        %1063 = vmatpush1.bf16.msra.mxu0 %v1030
        %1064 = vmatprep.subr.bf16.mxu0 0
        %1065 = vmatpush1.bf16.msra.mxu0 %v1031
        %1066 = vmatprep.subr.bf16.mxu0 0
        %1067 = vmatpush1.bf16.msra.mxu0 %v1032
        %1068 = vmatprep.subr.bf16.mxu0 0
        %1069 = vmatpush1.bf16.msra.mxu0 %v1033
        %1070 = vmatprep.subr.bf16.mxu0 0
        %1071 = vmatpush1.bf16.msra.mxu0 %v1034
        %1072 = vmatprep.subr.bf16.mxu0 0
        %1073 = vmatpush1.bf16.msra.mxu0 %v1035
        %1074 = vmatprep.subr.bf16.mxu0 0
        %1075 = vmatpush1.bf16.msra.mxu0 %v1036
        %1076 = vmatprep.subr.bf16.mxu0 0
        %1077 = vmatpush1.bf16.msra.mxu0 %v1037
        %1078 = vmatprep.subr.bf16.mxu0 0
        %1079 = vmatpush1.bf16.msra.mxu0 %v1038
        %1080 = vmatprep.subr.bf16.mxu0 0
        %1081 = vmatpush1.bf16.msra.mxu0 %v1039
        %1082 = vmatprep.subr.bf16.mxu0 0
        %1083 = vmatpush1.bf16.msra.mxu0 %v1040
        %1084 = vmatprep.subr.bf16.mxu0 0
        %1085 = vmatpush1.bf16.msra.mxu0 %v1041
        %1086 = vmatprep.subr.bf16.mxu0 0
        %1087 = vmatpush1.bf16.msra.mxu0 %v1042
        %1088 = vmatprep.subr.bf16.mxu0 0
        %1089 = vmatpush1.bf16.msra.mxu0 %v1043
        %1090 = vmatprep.subr.bf16.mxu0 0
        %1091 = vmatpush1.bf16.msra.mxu0 %v1044
        %1092 = vmatprep.subr.bf16.mxu0 0
        %1093 = vmatpush1.bf16.msra.mxu0 %v1045
        %1094 = vmatprep.mubr.bf16.mxu0 %v932
        %1095 = vmatmul.mubr.bf16.gmra.mrb[0].mxu0 %v893
        %v1096 = vpop.f32.mrb[0].mxu0
        %v1097 = vadd.f32 0.0, %v1096
        %v1098 = vpop.f32.mrb[0].mxu0
        %v1099 = vpop.f32.mrb[0].mxu0
        %v1100 = vpop.f32.mrb[0].mxu0
        %1101 = vdwg.mxu0
        %1102 = vst [vmem:[%s246] sm:$0xff] %v1097
        %s1103 = sand.u32 %s143, 1
        %s1104 = scalar_lea.sflag [#allocation4], %s1103
        %s1105 = sand.u32 %s143, 1
        %s1106 = smul.addr %s1105, 8
        %s1107 = scalar_lea.vmem [#allocation5], %s1106
        // Predicated region
        $region45: #{tpu_custom_call.1} parent=39 // pred_check
          %p1108 = pneg %p153
        $region46: #{tpu_custom_call.1} parent=39 // pred_check_branch
          %1110 = sbr.rel (%p1108) target = $region48
        $region47: #{tpu_custom_call.1} parent=39 // pred_region
          %s1112 = ssub.s32 128, 128
          %1113 = vsyncadd %s1104, %s1112
          %s1114 = smul.addr %s20, 128
          %s1115 = scalar_lea.hbm %s5, %s1114
          %s1117 = sshll.u32 %s1107, 4
          %s1118 = int_to_ptr.vmem [resolvable:$true] %s1117
          %1120 = dma.vmem_to_hbm [thread:$0]  %s1118, 128, %s1115, %s1104
        $region48: #{tpu_custom_call.1} parent=39 // pred_fallthru
          _
      $region40: #{tpu_custom_call.1} parent=5 // pred_fallthru
        _
      %p1121 = scmp.le.s32.totalorder 2, %s15
      // Predicated region
      $region49: #{tpu_custom_call.1} parent=5 // pred_check
        %p1122 = pneg %p1121
      $region50: #{tpu_custom_call.1} parent=5 // pred_check_branch
        %1124 = sbr.rel (%p1122) target = $region52
      $region51: #{tpu_custom_call.1} parent=5 // pred_region
        %s1125 = ssub.s32 %s15, 2
        // Predicated region
        $region53: #{tpu_custom_call.1} parent=51 // pred_check
          %p1126 = pneg %p159
        $region54: #{tpu_custom_call.1} parent=51 // pred_check_branch
          %1128 = sbr.rel (%p1126) target = $region56
        $region55: #{tpu_custom_call.1} parent=51 // pred_region
          %s1129 = sand.u32 %s144, 1
          %s1130 = scalar_lea.sflag [#allocation4], %s1129
          %s1131 = sand.u32 %s144, 1
          %s1132 = smul.addr %s1131, 8
          %s1133 = scalar_lea.vmem [#allocation5], %s1132
          %1134 = dma.done %s1130, 128
        $region56: #{tpu_custom_call.1} parent=51 // pred_fallthru
          _
      $region52: #{tpu_custom_call.1} parent=5 // pred_fallthru
        _
    $region6: #{tpu_custom_call.1} parent=1 // loop_footer
      %s19 = sadd.s32 1, %s15
    $region7: #{tpu_custom_call.1} parent=1 // loop_footer_branch
      %14 = sbr.rel target = $region3
    $region8: #{tpu_custom_call.1} parent=1 // loop_exit
      _
    %1135 = vsyncpa [#allocation3], 1
    %s1136 = scalar_lea.sflag [#allocation3], 1
    %1137 = vsyncpa %s1136, 1
    %1138 = vsyncpa [#allocation4], 1
    %s1139 = scalar_lea.sflag [#allocation4], 1
    %1140 = vsyncpa %s1139, 1

</llo_original>
